<compile_context>
chip_gen: v6e
topology: v6e:2x2x1
jax: 0.10.0
libtpu: 0.0.40
codegen_flags: <defaults>
</compile_context>

<pallas_src>
import functools

import jax
import jax.numpy as jnp
from jax.experimental import pallas as pl
from jax.experimental.pallas import tpu as pltpu


def _round_up(x, m):
    return (x + m - 1) // m * m


def _mlp_kernel(s_ref, a_ref, w1s_ref, w1a_ref, b1_ref, w2_ref, b2_ref,
                w3_ref, b3_ref, o_ref):
    """One batch tile of the 3-layer tanh MLP in row-packed (slab) layout.

    Each activation ref packs `rps` batch rows along the 128-lane axis and the
    weight refs are the matching block-diagonal expansions, so every load,
    matmul, tanh and the final store run lane-dense (unmasked vst, K,N >= 128).
    """
    b1 = b1_ref[...]          # (1, rps*h1) f32, hoisted once per grid step
    b2 = b2_ref[...]
    b3 = b3_ref[...]

    # Layer 1: concat(s, a) fused as two dots into one f32 accumulator.
    # TODO(synk): single-dot variant via an in-kernel lane concat of s|a (the
    # a-slab starts on a vreg boundary) if the two weight-push sequences ever
    # become the binding vex-slot cost.
    h = jnp.dot(s_ref[...], w1s_ref[...], preferred_element_type=jnp.float32)
    h = h + jnp.dot(a_ref[...], w1a_ref[...], preferred_element_type=jnp.float32)
    h = jnp.tanh(h + b1)

    # Layer 2.
    h = jnp.tanh(
        jnp.dot(h.astype(w2_ref.dtype), w2_ref[...],
                preferred_element_type=jnp.float32) + b2)

    # Output layer, no activation; lane-dense (unmasked) store.
    out = jnp.dot(h.astype(w3_ref.dtype), w3_ref[...],
                  preferred_element_type=jnp.float32) + b3
    o_ref[...] = out.astype(o_ref.dtype)


@functools.partial(jax.jit, static_argnames=("tile_b", "compute_dtype"))
def vector_sa2s_forward(s, a, params, *, tile_b=None, compute_dtype=jnp.bfloat16):
    """Forward pass of VectorSA2S. s: (B, s_dim), a: (B, a_dim).

    compute_dtype: dtype of the MXU dot inputs (accumulation, bias-add and tanh
    are always f32). Default bf16; pass jnp.float32 (or None) for exact f32.
    """
    w1, b1, w2, b2, w3, b3 = (params["w1"], params["b1"], params["w2"],
                              params["b2"], params["w3"], params["b3"])
    B, s_dim = s.shape
    a_dim = a.shape[1]
    h1 = w1.shape[1]
    h2 = w2.shape[1]
    out_dim = w3.shape[1]
    out_dtype = s.dtype

    # ---- Row-packing ("slab") factor --------------------------------------
    # Pack `rps` batch rows along the 128-lane axis (free contiguous HBM
    # reshape); weights become block-diagonal expansions.  rps=8 for this
    # module (all feature widths <= 32); degrades gracefully to 1 for wide
    # feature dims, which recovers the plain per-row kernel.
    max_dim = max(s_dim, a_dim, h1, h2, out_dim)
    rps = max(1, min(8, 512 // max_dim))

    # Static split of W1 fuses the concat(s, a) into the kernel.
    w1s = w1[:s_dim]
    w1a = w1[s_dim:]
    eye = jnp.eye(rps, dtype=w1.dtype)
    w1s_b = jnp.kron(eye, w1s)                       # (rps*s_dim, rps*h1)
    w1a_b = jnp.kron(eye, w1a)                       # (rps*a_dim, rps*h1)
    w2_b = jnp.kron(eye, w2)                         # (rps*h1,   rps*h2)
    w3_b = jnp.kron(eye, w3)                         # (rps*h2,   rps*out)
    b1_b = jnp.tile(b1.reshape(1, h1), (1, rps)).astype(jnp.float32)
    b2_b = jnp.tile(b2.reshape(1, h2), (1, rps)).astype(jnp.float32)
    b3_b = jnp.tile(b3.reshape(1, out_dim), (1, rps)).astype(jnp.float32)

    # Optional low-precision dot inputs (zeros of the block-diagonal stay exact).
    if compute_dtype is not None:
        s = s.astype(compute_dtype)
        a = a.astype(compute_dtype)
        w1s_b = w1s_b.astype(compute_dtype)
        w1a_b = w1a_b.astype(compute_dtype)
        w2_b = w2_b.astype(compute_dtype)
        w3_b = w3_b.astype(compute_dtype)
    in_item = jnp.dtype(s.dtype).itemsize
    out_item = jnp.dtype(out_dtype).itemsize

    # ---- Slab views (only a <=rps-1 row pad when B % rps != 0) -------------
    padded_b = _round_up(B, rps)
    if padded_b != B:
        pad = padded_b - B
        s = jnp.pad(s, ((0, pad), (0, 0)))
        a = jnp.pad(a, ((0, pad), (0, 0)))
    n_slab = padded_b // rps
    s_slab = s.reshape(n_slab, rps * s_dim)
    a_slab = a.reshape(n_slab, rps * a_dim)
    out_lanes = rps * out_dim

    # ---- Per-generation VMEM budget ----------------------------------------
    try:
        vmem_cap = int(pltpu.get_tpu_info().vmem_capacity_bytes)
    except Exception:
        vmem_cap = 64 * 1024 * 1024          # conservative: v7x physical VMEM
    # 64 MiB scoped on v5e/v6e (128 MiB physical), 32 MiB on v7x (64 MiB).
    vmem_limit = int(min(vmem_cap // 2, 64 * 1024 * 1024))

    def lane_pad(n):
        return _round_up(n, 128)

    bytes_per_slab_row = (
        2 * lane_pad(rps * s_dim) * in_item            # s, double-buffered
        + 2 * lane_pad(rps * a_dim) * in_item          # a, double-buffered
        + 2 * lane_pad(out_lanes) * out_item           # out, double-buffered
        + 2 * (lane_pad(rps * h1) + lane_pad(rps * h2)) * 4)  # f32 temporaries
    cap_slab = max(8, (vmem_limit // 2) // bytes_per_slab_row)

    # ---- Batch tile (in slab rows) ------------------------------------------
    gran = 16 if in_item < 4 else 8          # keep bf16 blocks (16,128)-aligned
    if tile_b is not None:
        cand = max(1, pl.cdiv(int(tile_b), rps))
    else:
        cand = pl.cdiv(8192, rps)                                   # ~8K rows/step
        cand = min(cand, _round_up(pl.cdiv(n_slab, 2), gran))       # >=2 steps (v7x)
    cand = min(cand, cap_slab)
    if cand >= n_slab:
        tile_slab = n_slab                   # single (possibly ragged) block
    else:
        tile_slab = max(gran, (cand // gran) * gran)
        if tile_slab >= n_slab:
            tile_slab = n_slab
    grid = (pl.cdiv(n_slab, tile_slab),)

    def act_spec(lanes):
        return pl.BlockSpec((tile_slab, lanes), lambda i: (i, 0))

    def resident(arr):
        # Same full-array block every grid step -> stays resident in VMEM.
        return pl.BlockSpec(arr.shape, lambda i, _nd=arr.ndim: (0,) * _nd)

    flops = 2 * n_slab * rps * rps * ((s_dim + a_dim) * h1 + h1 * h2 + h2 * out_dim)
    transcendentals = padded_b * (h1 + h2)
    weight_bytes = sum(int(x.size) * jnp.dtype(x.dtype).itemsize
                       for x in (w1s_b, w1a_b, b1_b, w2_b, b2_b, w3_b, b3_b))
    bytes_accessed = (int(s_slab.size) * in_item + int(a_slab.size) * in_item
                      + n_slab * out_lanes * out_item + weight_bytes)

    out_slab = pl.pallas_call(
        _mlp_kernel,
        out_shape=jax.ShapeDtypeStruct((n_slab, out_lanes), out_dtype),
        grid=grid,
        in_specs=[
            act_spec(rps * s_dim),           # s slab tile
            act_spec(rps * a_dim),           # a slab tile
            resident(w1s_b), resident(w1a_b), resident(b1_b),
            resident(w2_b), resident(b2_b),
            resident(w3_b), resident(b3_b),
        ],
        out_specs=act_spec(out_lanes),
        compiler_params=pltpu.CompilerParams(
            # TODO(synk): switch to pltpu.CORE_PARALLEL / explicit core_map if
            # v7x profiling shows the batch grid running on a single TensorCore.
            dimension_semantics=("parallel",),
            vmem_limit_bytes=vmem_limit,
        ),
        cost_estimate=pl.CostEstimate(
            flops=int(flops),
            transcendentals=int(transcendentals),
            bytes_accessed=int(bytes_accessed),
        ),
    )(s_slab, a_slab, w1s_b, w1a_b, b1_b, w2_b, b2_b, w3_b, b3_b)

    out = out_slab.reshape(padded_b, out_dim)   # free contiguous reshape
    if padded_b != B:
        out = out[:B]
    return out


def init_params(key, s_dim, a_dim, hidden_units):
    """Deterministic init mimicking PyTorch nn.Linear default (U[-1/sqrt(fan_in), +])."""
    dims = [s_dim + a_dim] + list(hidden_units) + [s_dim]
    params = {}
    keys = jax.random.split(key, 2 * (len(dims) - 1))
    for i, (fan_in, fan_out) in enumerate(zip(dims[:-1], dims[1:])):
        bound = 1.0 / jnp.sqrt(jnp.float32(fan_in))
        w = jax.random.uniform(
            keys[2 * i], (fan_in, fan_out), jnp.float32, -bound, bound)
        b = jax.random.uniform(
            keys[2 * i + 1], (1, fan_out), jnp.float32, -bound, bound)
        params[f"w{i + 1}"] = w
        params[f"b{i + 1}"] = b
    return params


def _reference_forward(s, a, params):
    """Pure-JAX reference (mirrors the PyTorch module)."""
    x = jnp.concatenate([s, a], axis=-1)
    h = jnp.tanh(x @ params["w1"] + params["b1"])
    h = jnp.tanh(h @ params["w2"] + params["b2"])
    return h @ params["w3"] + params["b3"]


if __name__ == "__main__":
    s_dim = 16
    a_dim = 8
    hidden_units = [32, 32]

    key = jax.random.PRNGKey(0)
    k_s, k_a, k_p, k_s2, k_a2 = jax.random.split(key, 5)
    params = init_params(k_p, s_dim, a_dim, hidden_units)

    # Exact-semantics check: f32 compute path, single slab block.
    batch = 8
    s = jax.random.normal(k_s, (batch, s_dim), jnp.float32)
    a = jax.random.normal(k_a, (batch, a_dim), jnp.float32)
    out = jax.block_until_ready(
        vector_sa2s_forward(s, a, params, compute_dtype=jnp.float32))
    ref = _reference_forward(s, a, params)
    assert out.shape == (batch, s_dim), out.shape
    assert jnp.allclose(out, ref, atol=1e-5, rtol=1e-5), "mismatch vs reference (f32 small)"

    # Multi-tile grid with a ragged batch (exercises pipelined + masked path).
    batch2 = 300
    s2 = jax.random.normal(k_s2, (batch2, s_dim), jnp.float32)
    a2 = jax.random.normal(k_a2, (batch2, a_dim), jnp.float32)
    ref2 = _reference_forward(s2, a2, params)

    # f32 path: exact semantics across ragged blocks.
    out2_f32 = jax.block_until_ready(
        vector_sa2s_forward(s2, a2, params, tile_b=128, compute_dtype=jnp.float32))
    assert out2_f32.shape == (batch2, s_dim), out2_f32.shape
    assert jnp.allclose(out2_f32, ref2, atol=1e-5, rtol=1e-5), "mismatch vs reference (f32 grid)"

    # Default bf16-dot path: looser tolerance (f32 accumulation, bf16 operands).
    out2 = jax.block_until_ready(vector_sa2s_forward(s2, a2, params, tile_b=128))
    assert out2.shape == (batch2, s_dim), out2.shape
    assert jnp.allclose(out2, ref2, atol=1e-1, rtol=1e-2), "mismatch vs reference (bf16 grid)"

    print("KERNEL_OK")
</pallas_src>

<mosaic_0001>
module attributes {stable_mosaic.version = 11 : i64} {
  func.func @_mlp_kernel(%arg0: i32, %arg1: memref<1x128xf32, #tpu.memory_space<vmem>>, %arg2: memref<1x64xf32, #tpu.memory_space<vmem>>, %arg3: memref<128x256xf32, #tpu.memory_space<vmem>>, %arg4: memref<64x256xf32, #tpu.memory_space<vmem>>, %arg5: memref<1x256xf32, #tpu.memory_space<vmem>>, %arg6: memref<256x256xf32, #tpu.memory_space<vmem>>, %arg7: memref<1x256xf32, #tpu.memory_space<vmem>>, %arg8: memref<256x128xf32, #tpu.memory_space<vmem>>, %arg9: memref<1x128xf32, #tpu.memory_space<vmem>>, %arg10: memref<1x128xf32, #tpu.memory_space<vmem>>) attributes {dimension_semantics = [#tpu.dimension_semantics<parallel>], iteration_bounds = array<i64: 1>, scalar_prefetch = 0 : i64, scratch_operands = 0 : i64, tpu.core_type = #tpu.core_type<tc>, window_params = [{transform_indices = @transform_0, window_bounds = array<i64: 1, 128>}, {transform_indices = @transform_1, window_bounds = array<i64: 1, 64>}, {pipeline_mode = #tpu.pipeline_mode<synchronous>, transform_indices = @transform_2, window_bounds = array<i64: 128, 256>}, {pipeline_mode = #tpu.pipeline_mode<synchronous>, transform_indices = @transform_3, window_bounds = array<i64: 64, 256>}, {pipeline_mode = #tpu.pipeline_mode<synchronous>, transform_indices = @transform_4, window_bounds = array<i64: 1, 256>}, {pipeline_mode = #tpu.pipeline_mode<synchronous>, transform_indices = @transform_5, window_bounds = array<i64: 256, 256>}, {pipeline_mode = #tpu.pipeline_mode<synchronous>, transform_indices = @transform_6, window_bounds = array<i64: 1, 256>}, {pipeline_mode = #tpu.pipeline_mode<synchronous>, transform_indices = @transform_7, window_bounds = array<i64: 256, 128>}, {pipeline_mode = #tpu.pipeline_mode<synchronous>, transform_indices = @transform_8, window_bounds = array<i64: 1, 128>}, {transform_indices = @transform_9, window_bounds = array<i64: 1, 128>}]} {
    %c0 = arith.constant 0 : index
    %c0_0 = arith.constant 0 : index
    %0 = vector.load %arg5[%c0, %c0_0] : memref<1x256xf32, #tpu.memory_space<vmem>>, vector<1x256xf32>
    %c0_1 = arith.constant 0 : index
    %c0_2 = arith.constant 0 : index
    %1 = vector.load %arg7[%c0_1, %c0_2] : memref<1x256xf32, #tpu.memory_space<vmem>>, vector<1x256xf32>
    %c0_3 = arith.constant 0 : index
    %c0_4 = arith.constant 0 : index
    %2 = vector.load %arg9[%c0_3, %c0_4] : memref<1x128xf32, #tpu.memory_space<vmem>>, vector<1x128xf32>
    %c0_5 = arith.constant 0 : index
    %c0_6 = arith.constant 0 : index
    %3 = vector.load %arg1[%c0_5, %c0_6] : memref<1x128xf32, #tpu.memory_space<vmem>>, vector<1x128xf32>
    %c0_7 = arith.constant 0 : index
    %c0_8 = arith.constant 0 : index
    %4 = vector.load %arg3[%c0_7, %c0_8] : memref<128x256xf32, #tpu.memory_space<vmem>>, vector<128x256xf32>
    %cst = arith.constant dense<0.000000e+00> : vector<1x256xf32>
    %5 = tpu.matmul %3, %4, %cst {dimension_numbers = #tpu.dot_dimension_numbers<[1], [0], [0], [1], [0, 0, 1, 1], [], []>} : vector<1x128xf32>, vector<128x256xf32>, vector<1x256xf32> -> vector<1x256xf32>
    %c0_9 = arith.constant 0 : index
    %c0_10 = arith.constant 0 : index
    %6 = vector.load %arg2[%c0_9, %c0_10] : memref<1x64xf32, #tpu.memory_space<vmem>>, vector<1x64xf32>
    %c0_11 = arith.constant 0 : index
    %c0_12 = arith.constant 0 : index
    %7 = vector.load %arg4[%c0_11, %c0_12] : memref<64x256xf32, #tpu.memory_space<vmem>>, vector<64x256xf32>
    %cst_13 = arith.constant dense<0.000000e+00> : vector<1x256xf32>
    %8 = tpu.matmul %6, %7, %cst_13 {dimension_numbers = #tpu.dot_dimension_numbers<[1], [0], [0], [1], [0, 0, 1, 1], [], []>} : vector<1x64xf32>, vector<64x256xf32>, vector<1x256xf32> -> vector<1x256xf32>
    %9 = arith.addf %5, %8 : vector<1x256xf32>
    %10 = arith.addf %9, %0 : vector<1x256xf32>
    %11 = math.tanh %10 : vector<1x256xf32>
    %c0_14 = arith.constant 0 : index
    %c0_15 = arith.constant 0 : index
    %12 = vector.load %arg6[%c0_14, %c0_15] : memref<256x256xf32, #tpu.memory_space<vmem>>, vector<256x256xf32>
    %cst_16 = arith.constant dense<0.000000e+00> : vector<1x256xf32>
    %13 = tpu.matmul %11, %12, %cst_16 {dimension_numbers = #tpu.dot_dimension_numbers<[1], [0], [0], [1], [0, 0, 1, 1], [], []>} : vector<1x256xf32>, vector<256x256xf32>, vector<1x256xf32> -> vector<1x256xf32>
    %14 = arith.addf %13, %1 : vector<1x256xf32>
    %15 = math.tanh %14 : vector<1x256xf32>
    %c0_17 = arith.constant 0 : index
    %c0_18 = arith.constant 0 : index
    %16 = vector.load %arg8[%c0_17, %c0_18] : memref<256x128xf32, #tpu.memory_space<vmem>>, vector<256x128xf32>
    %cst_19 = arith.constant dense<0.000000e+00> : vector<1x128xf32>
    %17 = tpu.matmul %15, %16, %cst_19 {dimension_numbers = #tpu.dot_dimension_numbers<[1], [0], [0], [1], [0, 0, 1, 1], [], []>} : vector<1x256xf32>, vector<256x128xf32>, vector<1x128xf32> -> vector<1x128xf32>
    %18 = arith.addf %17, %2 : vector<1x128xf32>
    %c0_20 = arith.constant 0 : index
    %c0_21 = arith.constant 0 : index
    %19 = vector.load %arg10[%c0_20, %c0_21] : memref<1x128xf32, #tpu.memory_space<vmem>>, vector<1x128xf32>
    tpu.vector_store %arg10[%c0_20, %c0_21], %18 {strides = array<i32>} : memref<1x128xf32, #tpu.memory_space<vmem>>, vector<1x128xf32>,
    return
  }
  func.func @transform_0(%arg0: i32) -> (i32, i32) {
    %c0_i32 = arith.constant 0 : i32
    %c0_i32_0 = arith.constant 0 : i32
    return %arg0, %c0_i32 : i32, i32
  }
  func.func @transform_1(%arg0: i32) -> (i32, i32) {
    %c0_i32 = arith.constant 0 : i32
    %c0_i32_0 = arith.constant 0 : i32
    return %arg0, %c0_i32 : i32, i32
  }
  func.func @transform_2(%arg0: i32) -> (i32, i32) {
    %c0_i32 = arith.constant 0 : i32
    %c0_i32_0 = arith.constant 0 : i32
    %c0_i32_1 = arith.constant 0 : i32
    return %c0_i32, %c0_i32_0 : i32, i32
  }
  func.func @transform_3(%arg0: i32) -> (i32, i32) {
    %c0_i32 = arith.constant 0 : i32
    %c0_i32_0 = arith.constant 0 : i32
    %c0_i32_1 = arith.constant 0 : i32
    return %c0_i32, %c0_i32_0 : i32, i32
  }
  func.func @transform_4(%arg0: i32) -> (i32, i32) {
    %c0_i32 = arith.constant 0 : i32
    %c0_i32_0 = arith.constant 0 : i32
    %c0_i32_1 = arith.constant 0 : i32
    return %c0_i32, %c0_i32_0 : i32, i32
  }
  func.func @transform_5(%arg0: i32) -> (i32, i32) {
    %c0_i32 = arith.constant 0 : i32
    %c0_i32_0 = arith.constant 0 : i32
    %c0_i32_1 = arith.constant 0 : i32
    return %c0_i32, %c0_i32_0 : i32, i32
  }
  func.func @transform_6(%arg0: i32) -> (i32, i32) {
    %c0_i32 = arith.constant 0 : i32
    %c0_i32_0 = arith.constant 0 : i32
    %c0_i32_1 = arith.constant 0 : i32
    return %c0_i32, %c0_i32_0 : i32, i32
  }
  func.func @transform_7(%arg0: i32) -> (i32, i32) {
    %c0_i32 = arith.constant 0 : i32
    %c0_i32_0 = arith.constant 0 : i32
    %c0_i32_1 = arith.constant 0 : i32
    return %c0_i32, %c0_i32_0 : i32, i32
  }
  func.func @transform_8(%arg0: i32) -> (i32, i32) {
    %c0_i32 = arith.constant 0 : i32
    %c0_i32_0 = arith.constant 0 : i32
    %c0_i32_1 = arith.constant 0 : i32
    return %c0_i32, %c0_i32_0 : i32, i32
  }
  func.func @transform_9(%arg0: i32) -> (i32, i32) {
    %c0_i32 = arith.constant 0 : i32
    %c0_i32_0 = arith.constant 0 : i32
    return %arg0, %c0_i32 : i32, i32
  }
}

</mosaic_0001>

<llo_original>
// kernel: vector_sa2s_forward.1
$region0: #{vector_sa2s_forward.1}
  #allocation0 [shape = 'u32[]', space=smem, size = 0x4, offset = 0x4, fixed_abs, tag = 'smem constant byte address 0x4 - core index']
  #allocation1 [shape = 'u32[144,128]{1,0:T(1,128)}', space=vmem, size = 0x12000, scoped, tag = 'internal scratch']
  %s0 = inlined_call_operand.vmem [shape: f32[1,128], index: 0, kind: input, shape index: {}]
  %s1 = inlined_call_operand.vmem [shape: f32[1,64], index: 1, kind: input, shape index: {}]
  %s2 = inlined_call_operand.vmem [shape: f32[128,256], index: 2, kind: input, shape index: {}]
  %s3 = inlined_call_operand.vmem [shape: f32[64,256], index: 3, kind: input, shape index: {}]
  %s4 = inlined_call_operand.vmem [shape: f32[1,256], index: 4, kind: input, shape index: {}]
  %s5 = inlined_call_operand.vmem [shape: f32[256,256], index: 5, kind: input, shape index: {}]
  %s6 = inlined_call_operand.vmem [shape: f32[1,256], index: 6, kind: input, shape index: {}]
  %s7 = inlined_call_operand.vmem [shape: f32[256,128], index: 7, kind: input, shape index: {}]
  %s8 = inlined_call_operand.vmem [shape: f32[1,128], index: 8, kind: input, shape index: {}]
  %s9 = inlined_call_operand.vmem [shape: f32[1,128], index: 9, kind: output, shape index: {}]
  %s10 = sld [smem:[#allocation0]]
  $region46: #{vector_sa2s_forward.1} parent=0
    _
  %s12 = ssub.s32 1, %s10
  %s13 = scalar_select 0, %s12, %s10
  // Predicated region
  $region2: #{vector_sa2s_forward.1} parent=0 // pred_check
    _
  $region3: #{vector_sa2s_forward.1} parent=0 // pred_check_branch
    %15 = sbr.rel (0) target = $region5
  $region4: #{vector_sa2s_forward.1} parent=0 // pred_region
    _
  $region5: #{vector_sa2s_forward.1} parent=0 // pred_fallthru
    _
  // Predicated region
  $region6: #{vector_sa2s_forward.1} parent=0 // pred_check
    _
  $region7: #{vector_sa2s_forward.1} parent=0 // pred_check_branch
    %17 = sbr.rel (0) target = $region9
  $region8: #{vector_sa2s_forward.1} parent=0 // pred_region
    _
  $region9: #{vector_sa2s_forward.1} parent=0 // pred_fallthru
    _
  // Predicated region
  $region10: #{vector_sa2s_forward.1} parent=0 // pred_check
    _
  $region11: #{vector_sa2s_forward.1} parent=0 // pred_check_branch
    %19 = sbr.rel (0) target = $region13
  $region12: #{vector_sa2s_forward.1} parent=0 // pred_region
    _
  $region13: #{vector_sa2s_forward.1} parent=0 // pred_fallthru
    _
  // Predicated region
  $region14: #{vector_sa2s_forward.1} parent=0 // pred_check
    _
  $region15: #{vector_sa2s_forward.1} parent=0 // pred_check_branch
    %21 = sbr.rel (0) target = $region17
  $region16: #{vector_sa2s_forward.1} parent=0 // pred_region
    _
  $region17: #{vector_sa2s_forward.1} parent=0 // pred_fallthru
    _
  // Predicated region
  $region18: #{vector_sa2s_forward.1} parent=0 // pred_check
    _
  $region19: #{vector_sa2s_forward.1} parent=0 // pred_check_branch
    %23 = sbr.rel (0) target = $region21
  $region20: #{vector_sa2s_forward.1} parent=0 // pred_region
    _
  $region21: #{vector_sa2s_forward.1} parent=0 // pred_fallthru
    _
  // Predicated region
  $region22: #{vector_sa2s_forward.1} parent=0 // pred_check
    _
  $region23: #{vector_sa2s_forward.1} parent=0 // pred_check_branch
    %25 = sbr.rel (0) target = $region25
  $region24: #{vector_sa2s_forward.1} parent=0 // pred_region
    _
  $region25: #{vector_sa2s_forward.1} parent=0 // pred_fallthru
    _
  // Predicated region
  $region26: #{vector_sa2s_forward.1} parent=0 // pred_check
    _
  $region27: #{vector_sa2s_forward.1} parent=0 // pred_check_branch
    %27 = sbr.rel (0) target = $region29
  $region28: #{vector_sa2s_forward.1} parent=0 // pred_region
    _
  $region29: #{vector_sa2s_forward.1} parent=0 // pred_fallthru
    _
  // Predicated region
  $region30: #{vector_sa2s_forward.1} parent=0 // pred_check
    _
  $region31: #{vector_sa2s_forward.1} parent=0 // pred_check_branch
    %29 = sbr.rel (0) target = $region33
  $region32: #{vector_sa2s_forward.1} parent=0 // pred_region
    _
  $region33: #{vector_sa2s_forward.1} parent=0 // pred_fallthru
    _
  // Predicated region
  $region34: #{vector_sa2s_forward.1} parent=0 // pred_check
    _
  $region35: #{vector_sa2s_forward.1} parent=0 // pred_check_branch
    %31 = sbr.rel (0) target = $region37
  $region36: #{vector_sa2s_forward.1} parent=0 // pred_region
    _
  $region37: #{vector_sa2s_forward.1} parent=0 // pred_fallthru
    _
  %v32 = vld [vmem:[%s4] sm:$0x3]
  %v33 = vld [vmem:[%s6] sm:$0x3]
  %v34 = vld [vmem:[%s8] sm:$0x1]
  %v35 = vld [vmem:[%s0] sm:$0x1]
  %v36 = vld [vmem:[%s2] sm:$0xff]
  %v37 = vld [vmem:[%s2 + $0x8] sm:$0xff]
  %v38 = vld [vmem:[%s2 + $0x10] sm:$0xff]
  %v39 = vld [vmem:[%s2 + $0x18] sm:$0xff]
  %v40 = vld [vmem:[%s2 + $0x20] sm:$0xff]
  %v41 = vld [vmem:[%s2 + $0x28] sm:$0xff]
  %v42 = vld [vmem:[%s2 + $0x30] sm:$0xff]
  %v43 = vld [vmem:[%s2 + $0x38] sm:$0xff]
  %v44 = vld [vmem:[%s2 + $0x40] sm:$0xff]
  %v45 = vld [vmem:[%s2 + $0x48] sm:$0xff]
  %v46 = vld [vmem:[%s2 + $0x50] sm:$0xff]
  %v47 = vld [vmem:[%s2 + $0x58] sm:$0xff]
  %v48 = vld [vmem:[%s2 + $0x60] sm:$0xff]
  %v49 = vld [vmem:[%s2 + $0x68] sm:$0xff]
  %v50 = vld [vmem:[%s2 + $0x70] sm:$0xff]
  %v51 = vld [vmem:[%s2 + $0x78] sm:$0xff]
  %v52 = vld [vmem:[%s2 + $0x80] sm:$0xff]
  %v53 = vld [vmem:[%s2 + $0x88] sm:$0xff]
  %v54 = vld [vmem:[%s2 + $0x90] sm:$0xff]
  %v55 = vld [vmem:[%s2 + $0x98] sm:$0xff]
  %v56 = vld [vmem:[%s2 + $0xa0] sm:$0xff]
  %v57 = vld [vmem:[%s2 + $0xa8] sm:$0xff]
  %v58 = vld [vmem:[%s2 + $0xb0] sm:$0xff]
  %v59 = vld [vmem:[%s2 + $0xb8] sm:$0xff]
  %v60 = vld [vmem:[%s2 + $0xc0] sm:$0xff]
  %v61 = vld [vmem:[%s2 + $0xc8] sm:$0xff]
  %v62 = vld [vmem:[%s2 + $0xd0] sm:$0xff]
  %v63 = vld [vmem:[%s2 + $0xd8] sm:$0xff]
  %v64 = vld [vmem:[%s2 + $0xe0] sm:$0xff]
  %v65 = vld [vmem:[%s2 + $0xe8] sm:$0xff]
  %v66 = vld [vmem:[%s2 + $0xf0] sm:$0xff]
  %v67 = vld [vmem:[%s2 + $0xf8] sm:$0xff]
  %v68 = vld [vmem:[%s1] sm:$0x1]
  %v69 = vld [vmem:[%s3] sm:$0xff]
  %v70 = vld [vmem:[%s3 + $0x8] sm:$0xff]
  %v71 = vld [vmem:[%s3 + $0x10] sm:$0xff]
  %v72 = vld [vmem:[%s3 + $0x18] sm:$0xff]
  %v73 = vld [vmem:[%s3 + $0x20] sm:$0xff]
  %v74 = vld [vmem:[%s3 + $0x28] sm:$0xff]
  %v75 = vld [vmem:[%s3 + $0x30] sm:$0xff]
  %v76 = vld [vmem:[%s3 + $0x38] sm:$0xff]
  %v77 = vld [vmem:[%s3 + $0x40] sm:$0xff]
  %v78 = vld [vmem:[%s3 + $0x48] sm:$0xff]
  %v79 = vld [vmem:[%s3 + $0x50] sm:$0xff]
  %v80 = vld [vmem:[%s3 + $0x58] sm:$0xff]
  %v81 = vld [vmem:[%s3 + $0x60] sm:$0xff]
  %v82 = vld [vmem:[%s3 + $0x68] sm:$0xff]
  %v83 = vld [vmem:[%s3 + $0x70] sm:$0xff]
  %v84 = vld [vmem:[%s3 + $0x78] sm:$0xff]
  %vm85 = vcmask 523264
  %v87 = vsel %vm85, %v68, 0
  %89 = vmatprep.subr.mxu0 0.0
  %90 = vmatpush1.msra.mxu0 0.0
  %91 = vmatprep.subr.mxu0 0.0
  %92 = vmatpush1.msra.mxu0 0.0
  %93 = vmatprep.subr.mxu0 0.0
  %94 = vmatpush1.msra.mxu0 0.0
  %95 = vmatprep.subr.mxu0 0.0
  %96 = vmatpush1.msra.mxu0 0.0
  %97 = vmatprep.subr.mxu0 0.0
  %98 = vmatpush1.msra.mxu0 0.0
  %99 = vmatprep.subr.mxu0 0.0
  %100 = vmatpush1.msra.mxu0 0.0
  %101 = vmatprep.subr.mxu0 0.0
  %102 = vmatpush1.msra.mxu0 0.0
  %103 = vmatprep.subr.mxu0 0.0
  %104 = vmatpush1.msra.mxu0 0.0
  %105 = vmatprep.subr.mxu0 %v84
  %106 = vmatpush1.msra.mxu0 %v83
  %107 = vmatprep.subr.mxu0 %v82
  %108 = vmatpush1.msra.mxu0 %v81
  %109 = vmatprep.subr.mxu0 %v80
  %110 = vmatpush1.msra.mxu0 %v79
  %111 = vmatprep.subr.mxu0 %v78
  %112 = vmatpush1.msra.mxu0 %v77
  %113 = vmatprep.subr.mxu0 %v76
  %114 = vmatpush1.msra.mxu0 %v75
  %115 = vmatprep.subr.mxu0 %v74
  %116 = vmatpush1.msra.mxu0 %v73
  %117 = vmatprep.subr.mxu0 %v72
  %118 = vmatpush1.msra.mxu0 %v71
  %119 = vmatprep.subr.mxu0 %v70
  %120 = vmatpush1.msra.mxu0 %v69
  %121 = vmatprep.subr.mxu0 0.0
  %122 = vmatpush2.msra.mxu0 0.0
  %123 = vmatprep.subr.mxu0 0.0
  %124 = vmatpush2.msra.mxu0 0.0
  %125 = vmatprep.subr.mxu0 0.0
  %126 = vmatpush2.msra.mxu0 0.0
  %127 = vmatprep.subr.mxu0 0.0
  %128 = vmatpush2.msra.mxu0 0.0
  %129 = vmatprep.subr.mxu0 0.0
  %130 = vmatpush2.msra.mxu0 0.0
  %131 = vmatprep.subr.mxu0 0.0
  %132 = vmatpush2.msra.mxu0 0.0
  %133 = vmatprep.subr.mxu0 0.0
  %134 = vmatpush2.msra.mxu0 0.0
  %135 = vmatprep.subr.mxu0 0.0
  %136 = vmatpush2.msra.mxu0 0.0
  %137 = vmatprep.subr.mxu0 0.0
  %138 = vmatpush2.msra.mxu0 0.0
  %139 = vmatprep.subr.mxu0 0.0
  %140 = vmatpush2.msra.mxu0 0.0
  %141 = vmatprep.subr.mxu0 0.0
  %142 = vmatpush2.msra.mxu0 0.0
  %143 = vmatprep.subr.mxu0 0.0
  %144 = vmatpush2.msra.mxu0 0.0
  %145 = vmatprep.subr.mxu0 0.0
  %146 = vmatpush2.msra.mxu0 0.0
  %147 = vmatprep.subr.mxu0 0.0
  %148 = vmatpush2.msra.mxu0 0.0
  %149 = vmatprep.subr.mxu0 0.0
  %150 = vmatpush2.msra.mxu0 0.0
  %151 = vmatprep.subr.mxu0 0.0
  %152 = vmatpush2.msra.mxu0 0.0
  %153 = vmatprep.mubr.f32.mxu0 0.0
  %154 = vmatmul.mubr.f32.gmra.mxu0 %v87
  %v155 = vpop.f32.mrf.mxu0
  %v156 = vadd.f32 0.0, %v155
  %v157 = vpop.f32.mrf.mxu0
  %v158 = vadd.f32 0.0, %v157
  %159 = vdwg.mxu0
  %160 = vmatprep.subr.mxu0 %v67
  %161 = vmatpush1.msra.mxu0 %v66
  %162 = vmatprep.subr.mxu0 %v65
  %163 = vmatpush1.msra.mxu0 %v64
  %164 = vmatprep.subr.mxu0 %v63
  %165 = vmatpush1.msra.mxu0 %v62
  %166 = vmatprep.subr.mxu0 %v61
  %167 = vmatpush1.msra.mxu0 %v60
  %168 = vmatprep.subr.mxu0 %v59
  %169 = vmatpush1.msra.mxu0 %v58
  %170 = vmatprep.subr.mxu0 %v57
  %171 = vmatpush1.msra.mxu0 %v56
  %172 = vmatprep.subr.mxu0 %v55
  %173 = vmatpush1.msra.mxu0 %v54
  %174 = vmatprep.subr.mxu0 %v53
  %175 = vmatpush1.msra.mxu0 %v52
  %176 = vmatprep.subr.mxu0 %v51
  %177 = vmatpush1.msra.mxu0 %v50
  %178 = vmatprep.subr.mxu0 %v49
  %179 = vmatpush1.msra.mxu0 %v48
  %180 = vmatprep.subr.mxu0 %v47
  %181 = vmatpush1.msra.mxu0 %v46
  %182 = vmatprep.subr.mxu0 %v45
  %183 = vmatpush1.msra.mxu0 %v44
  %184 = vmatprep.subr.mxu0 %v43
  %185 = vmatpush1.msra.mxu0 %v42
  %186 = vmatprep.subr.mxu0 %v41
  %187 = vmatpush1.msra.mxu0 %v40
  %188 = vmatprep.subr.mxu0 %v39
  %189 = vmatpush1.msra.mxu0 %v38
  %190 = vmatprep.subr.mxu0 %v37
  %191 = vmatpush1.msra.mxu0 %v36
  %192 = vmatprep.subr.mxu0 0.0
  %193 = vmatpush2.msra.mxu0 0.0
  %194 = vmatprep.subr.mxu0 0.0
  %195 = vmatpush2.msra.mxu0 0.0
  %196 = vmatprep.subr.mxu0 0.0
  %197 = vmatpush2.msra.mxu0 0.0
  %198 = vmatprep.subr.mxu0 0.0
  %199 = vmatpush2.msra.mxu0 0.0
  %200 = vmatprep.subr.mxu0 0.0
  %201 = vmatpush2.msra.mxu0 0.0
  %202 = vmatprep.subr.mxu0 0.0
  %203 = vmatpush2.msra.mxu0 0.0
  %204 = vmatprep.subr.mxu0 0.0
  %205 = vmatpush2.msra.mxu0 0.0
  %206 = vmatprep.subr.mxu0 0.0
  %207 = vmatpush2.msra.mxu0 0.0
  %208 = vmatprep.subr.mxu0 0.0
  %209 = vmatpush2.msra.mxu0 0.0
  %210 = vmatprep.subr.mxu0 0.0
  %211 = vmatpush2.msra.mxu0 0.0
  %212 = vmatprep.subr.mxu0 0.0
  %213 = vmatpush2.msra.mxu0 0.0
  %214 = vmatprep.subr.mxu0 0.0
  %215 = vmatpush2.msra.mxu0 0.0
  %216 = vmatprep.subr.mxu0 0.0
  %217 = vmatpush2.msra.mxu0 0.0
  %218 = vmatprep.subr.mxu0 0.0
  %219 = vmatpush2.msra.mxu0 0.0
  %220 = vmatprep.subr.mxu0 0.0
  %221 = vmatpush2.msra.mxu0 0.0
  %222 = vmatprep.subr.mxu0 0.0
  %223 = vmatpush2.msra.mxu0 0.0
  %224 = vmatprep.mubr.f32.mxu0 0.0
  %225 = vmatmul.mubr.f32.gmra.mxu0 %v35
  %v226 = vpop.f32.mrf.mxu0
  %v227 = vadd.f32 %v156, %v226
  %v228 = vpop.f32.mrf.mxu0
  %v229 = vadd.f32 %v158, %v228
  %230 = vdwg.mxu0
  %v232 = vlaneseq
  %v233 = vshrl.u32 %v232, 7
  %v234 = vsub.s32 0, %v233
  %v235 = vrot.slane %v32, %v234
  %v236 = vlaneseq
  %v237 = vshrl.u32 %v236, 7
  %v238 = vsub.s32 1, %v237
  %v239 = vrot.slane %v32, %v238
  %v242 = vadd.f32 %v227, %v235
  %v243 = vadd.f32 %v229, %v239
  %v244 = vtanh.pop %v242
  %v245 = vtanh.pop %v243
  %v246 = vld [vmem:[%s5] sm:$0xff]
  %v247 = vld [vmem:[%s5 + $0x8] sm:$0xff]
  %v248 = vld [vmem:[%s5 + $0x10] sm:$0xff]
  %v249 = vld [vmem:[%s5 + $0x18] sm:$0xff]
  %v250 = vld [vmem:[%s5 + $0x20] sm:$0xff]
  %v251 = vld [vmem:[%s5 + $0x28] sm:$0xff]
  %v252 = vld [vmem:[%s5 + $0x30] sm:$0xff]
  %v253 = vld [vmem:[%s5 + $0x38] sm:$0xff]
  %v254 = vld [vmem:[%s5 + $0x40] sm:$0xff]
  %v255 = vld [vmem:[%s5 + $0x48] sm:$0xff]
  %v256 = vld [vmem:[%s5 + $0x50] sm:$0xff]
  %v257 = vld [vmem:[%s5 + $0x58] sm:$0xff]
  %v258 = vld [vmem:[%s5 + $0x60] sm:$0xff]
  %v259 = vld [vmem:[%s5 + $0x68] sm:$0xff]
  %v260 = vld [vmem:[%s5 + $0x70] sm:$0xff]
  %v261 = vld [vmem:[%s5 + $0x78] sm:$0xff]
  %v262 = vld [vmem:[%s5 + $0x80] sm:$0xff]
  %v263 = vld [vmem:[%s5 + $0x88] sm:$0xff]
  %v264 = vld [vmem:[%s5 + $0x90] sm:$0xff]
  %v265 = vld [vmem:[%s5 + $0x98] sm:$0xff]
  %v266 = vld [vmem:[%s5 + $0xa0] sm:$0xff]
  %v267 = vld [vmem:[%s5 + $0xa8] sm:$0xff]
  %v268 = vld [vmem:[%s5 + $0xb0] sm:$0xff]
  %v269 = vld [vmem:[%s5 + $0xb8] sm:$0xff]
  %v270 = vld [vmem:[%s5 + $0xc0] sm:$0xff]
  %v271 = vld [vmem:[%s5 + $0xc8] sm:$0xff]
  %v272 = vld [vmem:[%s5 + $0xd0] sm:$0xff]
  %v273 = vld [vmem:[%s5 + $0xd8] sm:$0xff]
  %v274 = vld [vmem:[%s5 + $0xe0] sm:$0xff]
  %v275 = vld [vmem:[%s5 + $0xe8] sm:$0xff]
  %v276 = vld [vmem:[%s5 + $0xf0] sm:$0xff]
  %v277 = vld [vmem:[%s5 + $0xf8] sm:$0xff]
  %v278 = vld [vmem:[%s5 + $0x100] sm:$0xff]
  %v279 = vld [vmem:[%s5 + $0x108] sm:$0xff]
  %v280 = vld [vmem:[%s5 + $0x110] sm:$0xff]
  %v281 = vld [vmem:[%s5 + $0x118] sm:$0xff]
  %v282 = vld [vmem:[%s5 + $0x120] sm:$0xff]
  %v283 = vld [vmem:[%s5 + $0x128] sm:$0xff]
  %v284 = vld [vmem:[%s5 + $0x130] sm:$0xff]
  %v285 = vld [vmem:[%s5 + $0x138] sm:$0xff]
  %v286 = vld [vmem:[%s5 + $0x140] sm:$0xff]
  %v287 = vld [vmem:[%s5 + $0x148] sm:$0xff]
  %v288 = vld [vmem:[%s5 + $0x150] sm:$0xff]
  %v289 = vld [vmem:[%s5 + $0x158] sm:$0xff]
  %v290 = vld [vmem:[%s5 + $0x160] sm:$0xff]
  %v291 = vld [vmem:[%s5 + $0x168] sm:$0xff]
  %v292 = vld [vmem:[%s5 + $0x170] sm:$0xff]
  %v293 = vld [vmem:[%s5 + $0x178] sm:$0xff]
  %v294 = vld [vmem:[%s5 + $0x180] sm:$0xff]
  %v295 = vld [vmem:[%s5 + $0x188] sm:$0xff]
  %v296 = vld [vmem:[%s5 + $0x190] sm:$0xff]
  %v297 = vld [vmem:[%s5 + $0x198] sm:$0xff]
  %v298 = vld [vmem:[%s5 + $0x1a0] sm:$0xff]
  %v299 = vld [vmem:[%s5 + $0x1a8] sm:$0xff]
  %v300 = vld [vmem:[%s5 + $0x1b0] sm:$0xff]
  %v301 = vld [vmem:[%s5 + $0x1b8] sm:$0xff]
  %v302 = vld [vmem:[%s5 + $0x1c0] sm:$0xff]
  %v303 = vld [vmem:[%s5 + $0x1c8] sm:$0xff]
  %v304 = vld [vmem:[%s5 + $0x1d0] sm:$0xff]
  %v305 = vld [vmem:[%s5 + $0x1d8] sm:$0xff]
  %v306 = vld [vmem:[%s5 + $0x1e0] sm:$0xff]
  %v307 = vld [vmem:[%s5 + $0x1e8] sm:$0xff]
  %v308 = vld [vmem:[%s5 + $0x1f0] sm:$0xff]
  %v309 = vld [vmem:[%s5 + $0x1f8] sm:$0xff]
  %v311 = vlaneseq
  %v312 = vshrl.u32 %v311, 7
  %v313 = vsub.s32 0, %v312
  %v314 = vrot.slane %v33, %v313
  %v315 = vlaneseq
  %v316 = vshrl.u32 %v315, 7
  %v317 = vsub.s32 1, %v316
  %v318 = vrot.slane %v33, %v317
  %321 = vmatprep.subr.mxu0 %v277
  %322 = vmatpush1.msra.mxu0 %v276
  %323 = vmatprep.subr.mxu0 %v275
  %324 = vmatpush1.msra.mxu0 %v274
  %325 = vmatprep.subr.mxu0 %v273
  %326 = vmatpush1.msra.mxu0 %v272
  %327 = vmatprep.subr.mxu0 %v271
  %328 = vmatpush1.msra.mxu0 %v270
  %329 = vmatprep.subr.mxu0 %v269
  %330 = vmatpush1.msra.mxu0 %v268
  %331 = vmatprep.subr.mxu0 %v267
  %332 = vmatpush1.msra.mxu0 %v266
  %333 = vmatprep.subr.mxu0 %v265
  %334 = vmatpush1.msra.mxu0 %v264
  %335 = vmatprep.subr.mxu0 %v263
  %336 = vmatpush1.msra.mxu0 %v262
  %337 = vmatprep.subr.mxu0 %v261
  %338 = vmatpush1.msra.mxu0 %v260
  %339 = vmatprep.subr.mxu0 %v259
  %340 = vmatpush1.msra.mxu0 %v258
  %341 = vmatprep.subr.mxu0 %v257
  %342 = vmatpush1.msra.mxu0 %v256
  %343 = vmatprep.subr.mxu0 %v255
  %344 = vmatpush1.msra.mxu0 %v254
  %345 = vmatprep.subr.mxu0 %v253
  %346 = vmatpush1.msra.mxu0 %v252
  %347 = vmatprep.subr.mxu0 %v251
  %348 = vmatpush1.msra.mxu0 %v250
  %349 = vmatprep.subr.mxu0 %v249
  %350 = vmatpush1.msra.mxu0 %v248
  %351 = vmatprep.subr.mxu0 %v247
  %352 = vmatpush1.msra.mxu0 %v246
  %353 = vmatprep.subr.mxu0 %v309
  %354 = vmatpush2.msra.mxu0 %v308
  %355 = vmatprep.subr.mxu0 %v307
  %356 = vmatpush2.msra.mxu0 %v306
  %357 = vmatprep.subr.mxu0 %v305
  %358 = vmatpush2.msra.mxu0 %v304
  %359 = vmatprep.subr.mxu0 %v303
  %360 = vmatpush2.msra.mxu0 %v302
  %361 = vmatprep.subr.mxu0 %v301
  %362 = vmatpush2.msra.mxu0 %v300
  %363 = vmatprep.subr.mxu0 %v299
  %364 = vmatpush2.msra.mxu0 %v298
  %365 = vmatprep.subr.mxu0 %v297
  %366 = vmatpush2.msra.mxu0 %v296
  %367 = vmatprep.subr.mxu0 %v295
  %368 = vmatpush2.msra.mxu0 %v294
  %369 = vmatprep.subr.mxu0 %v293
  %370 = vmatpush2.msra.mxu0 %v292
  %371 = vmatprep.subr.mxu0 %v291
  %372 = vmatpush2.msra.mxu0 %v290
  %373 = vmatprep.subr.mxu0 %v289
  %374 = vmatpush2.msra.mxu0 %v288
  %375 = vmatprep.subr.mxu0 %v287
  %376 = vmatpush2.msra.mxu0 %v286
  %377 = vmatprep.subr.mxu0 %v285
  %378 = vmatpush2.msra.mxu0 %v284
  %379 = vmatprep.subr.mxu0 %v283
  %380 = vmatpush2.msra.mxu0 %v282
  %381 = vmatprep.subr.mxu0 %v281
  %382 = vmatpush2.msra.mxu0 %v280
  %383 = vmatprep.subr.mxu0 %v279
  %384 = vmatpush2.msra.mxu0 %v278
  %385 = vmatprep.mubr.f32.mxu0 %v245
  %386 = vmatmul.mubr.f32.gmra.mxu0 %v244
  %v387 = vpop.f32.mrf.mxu0
  %v388 = vadd.f32 %v314, %v387
  %v389 = vpop.f32.mrf.mxu0
  %v390 = vadd.f32 %v318, %v389
  %391 = vdwg.mxu0
  %v392 = vtanh.pop %v388
  %v393 = vtanh.pop %v390
  %v394 = vld [vmem:[%s7] sm:$0xff]
  %v395 = vld [vmem:[%s7 + $0x8] sm:$0xff]
  %v396 = vld [vmem:[%s7 + $0x10] sm:$0xff]
  %v397 = vld [vmem:[%s7 + $0x18] sm:$0xff]
  %v398 = vld [vmem:[%s7 + $0x20] sm:$0xff]
  %v399 = vld [vmem:[%s7 + $0x28] sm:$0xff]
  %v400 = vld [vmem:[%s7 + $0x30] sm:$0xff]
  %v401 = vld [vmem:[%s7 + $0x38] sm:$0xff]
  %v402 = vld [vmem:[%s7 + $0x40] sm:$0xff]
  %v403 = vld [vmem:[%s7 + $0x48] sm:$0xff]
  %v404 = vld [vmem:[%s7 + $0x50] sm:$0xff]
  %v405 = vld [vmem:[%s7 + $0x58] sm:$0xff]
  %v406 = vld [vmem:[%s7 + $0x60] sm:$0xff]
  %v407 = vld [vmem:[%s7 + $0x68] sm:$0xff]
  %v408 = vld [vmem:[%s7 + $0x70] sm:$0xff]
  %v409 = vld [vmem:[%s7 + $0x78] sm:$0xff]
  %v410 = vld [vmem:[%s7 + $0x80] sm:$0xff]
  %v411 = vld [vmem:[%s7 + $0x88] sm:$0xff]
  %v412 = vld [vmem:[%s7 + $0x90] sm:$0xff]
  %v413 = vld [vmem:[%s7 + $0x98] sm:$0xff]
  %v414 = vld [vmem:[%s7 + $0xa0] sm:$0xff]
  %v415 = vld [vmem:[%s7 + $0xa8] sm:$0xff]
  %v416 = vld [vmem:[%s7 + $0xb0] sm:$0xff]
  %v417 = vld [vmem:[%s7 + $0xb8] sm:$0xff]
  %v418 = vld [vmem:[%s7 + $0xc0] sm:$0xff]
  %v419 = vld [vmem:[%s7 + $0xc8] sm:$0xff]
  %v420 = vld [vmem:[%s7 + $0xd0] sm:$0xff]
  %v421 = vld [vmem:[%s7 + $0xd8] sm:$0xff]
  %v422 = vld [vmem:[%s7 + $0xe0] sm:$0xff]
  %v423 = vld [vmem:[%s7 + $0xe8] sm:$0xff]
  %v424 = vld [vmem:[%s7 + $0xf0] sm:$0xff]
  %v425 = vld [vmem:[%s7 + $0xf8] sm:$0xff]
  %426 = vmatprep.subr.mxu0 0.0
  %427 = vmatpush1.msra.mxu0 %v409
  %428 = vmatprep.subr.mxu0 0.0
  %429 = vmatpush1.msra.mxu0 %v408
  %430 = vmatprep.subr.mxu0 0.0
  %431 = vmatpush1.msra.mxu0 %v407
  %432 = vmatprep.subr.mxu0 0.0
  %433 = vmatpush1.msra.mxu0 %v406
  %434 = vmatprep.subr.mxu0 0.0
  %435 = vmatpush1.msra.mxu0 %v405
  %436 = vmatprep.subr.mxu0 0.0
  %437 = vmatpush1.msra.mxu0 %v404
  %438 = vmatprep.subr.mxu0 0.0
  %439 = vmatpush1.msra.mxu0 %v403
  %440 = vmatprep.subr.mxu0 0.0
  %441 = vmatpush1.msra.mxu0 %v402
  %442 = vmatprep.subr.mxu0 0.0
  %443 = vmatpush1.msra.mxu0 %v401
  %444 = vmatprep.subr.mxu0 0.0
  %445 = vmatpush1.msra.mxu0 %v400
  %446 = vmatprep.subr.mxu0 0.0
  %447 = vmatpush1.msra.mxu0 %v399
  %448 = vmatprep.subr.mxu0 0.0
  %449 = vmatpush1.msra.mxu0 %v398
  %450 = vmatprep.subr.mxu0 0.0
  %451 = vmatpush1.msra.mxu0 %v397
  %452 = vmatprep.subr.mxu0 0.0
  %453 = vmatpush1.msra.mxu0 %v396
  %454 = vmatprep.subr.mxu0 0.0
  %455 = vmatpush1.msra.mxu0 %v395
  %456 = vmatprep.subr.mxu0 0.0
  %457 = vmatpush1.msra.mxu0 %v394
  %458 = vmatprep.subr.mxu0 0.0
  %459 = vmatpush2.msra.mxu0 %v425
  %460 = vmatprep.subr.mxu0 0.0
  %461 = vmatpush2.msra.mxu0 %v424
  %462 = vmatprep.subr.mxu0 0.0
  %463 = vmatpush2.msra.mxu0 %v423
  %464 = vmatprep.subr.mxu0 0.0
  %465 = vmatpush2.msra.mxu0 %v422
  %466 = vmatprep.subr.mxu0 0.0
  %467 = vmatpush2.msra.mxu0 %v421
  %468 = vmatprep.subr.mxu0 0.0
  %469 = vmatpush2.msra.mxu0 %v420
  %470 = vmatprep.subr.mxu0 0.0
  %471 = vmatpush2.msra.mxu0 %v419
  %472 = vmatprep.subr.mxu0 0.0
  %473 = vmatpush2.msra.mxu0 %v418
  %474 = vmatprep.subr.mxu0 0.0
  %475 = vmatpush2.msra.mxu0 %v417
  %476 = vmatprep.subr.mxu0 0.0
  %477 = vmatpush2.msra.mxu0 %v416
  %478 = vmatprep.subr.mxu0 0.0
  %479 = vmatpush2.msra.mxu0 %v415
  %480 = vmatprep.subr.mxu0 0.0
  %481 = vmatpush2.msra.mxu0 %v414
  %482 = vmatprep.subr.mxu0 0.0
  %483 = vmatpush2.msra.mxu0 %v413
  %484 = vmatprep.subr.mxu0 0.0
  %485 = vmatpush2.msra.mxu0 %v412
  %486 = vmatprep.subr.mxu0 0.0
  %487 = vmatpush2.msra.mxu0 %v411
  %488 = vmatprep.subr.mxu0 0.0
  %489 = vmatpush2.msra.mxu0 %v410
  %490 = vmatprep.mubr.f32.mxu0 %v393
  %491 = vmatmul.mubr.f32.gmra.mxu0 %v392
  %v492 = vpop.f32.mrf.mxu0
  %v493 = vadd.f32 %v34, %v492
  %v494 = vpop.f32.mrf.mxu0
  %495 = vdwg.mxu0
  %496 = vst [vmem:[%s9] sm:$0x1] %v493
  // Predicated region
  $region38: #{vector_sa2s_forward.1} parent=0 // pred_check
    _
  $region39: #{vector_sa2s_forward.1} parent=0 // pred_check_branch
    %498 = sbr.rel (0) target = $region41
  $region40: #{vector_sa2s_forward.1} parent=0 // pred_region
    _
  $region41: #{vector_sa2s_forward.1} parent=0 // pred_fallthru
    _
  // Predicated region
  $region42: #{vector_sa2s_forward.1} parent=0 // pred_check
    _
  $region43: #{vector_sa2s_forward.1} parent=0 // pred_check_branch
    %500 = sbr.rel (0) target = $region45
  $region44: #{vector_sa2s_forward.1} parent=0 // pred_region
    _
  $region45: #{vector_sa2s_forward.1} parent=0 // pred_fallthru
    _

</llo_original>
